<compile_context>
chip_gen: v7x
topology: tpu7x:2x2x1
jax: 0.10.0
libtpu: 0.0.40
codegen_flags: <defaults>
</compile_context>

<pallas_src>
import functools

import jax
import jax.numpy as jnp
from jax import lax
from jax.experimental import pallas as pl
from jax.experimental.pallas import tpu as pltpu

IN_DIM = 64          # load_digits() feature dim
H1, H2, OUT_DIM = 300, 200, 10
H1_PAD, H2_PAD, OUT_PAD = 384, 256, 128   # lane-aligned (multiples of 128)
NEG_INF = -1e30


def _round_up(n, m):
    return (n + m - 1) // m * m


def _mlp_kernel(x_ref, w1_ref, b1_ref, w2_ref, b2_ref, w3_ref, b3_ref, o_ref):
    """Full MLP forward for one (TB, 64) batch tile; weights resident in VMEM.

    Padded hidden columns are harmless because the corresponding next-layer
    weight ROWS are zero; padded logit columns are masked to -inf before the
    softmax.  Padded batch rows (if any) produce garbage that the wrapper
    slices off.
    """
    x = x_ref[...].astype(jnp.bfloat16)                       # f32->bf16 on VPU

    # Layer 1: Linear(64 -> 384) + sigmoid (single EUP tanh per element)
    h1 = jnp.dot(x, w1_ref[...], preferred_element_type=jnp.float32) + b1_ref[...]
    h1 = 0.5 * jnp.tanh(0.5 * h1) + 0.5

    # Layer 2: Linear(384 -> 256) + sigmoid
    h2 = jnp.dot(h1.astype(jnp.bfloat16), w2_ref[...],
                 preferred_element_type=jnp.float32) + b2_ref[...]
    h2 = 0.5 * jnp.tanh(0.5 * h2) + 0.5

    # Layer 3: Linear(256 -> 128) + softmax over the 10 real classes
    logits = jnp.dot(h2.astype(jnp.bfloat16), w3_ref[...],
                     preferred_element_type=jnp.float32) + b3_ref[...]
    col = lax.broadcasted_iota(jnp.int32, logits.shape, 1)
    logits = jnp.where(col < OUT_DIM, logits, NEG_INF)        # mask padded classes
    m = jnp.max(logits, axis=-1, keepdims=True)
    e = jnp.exp(logits - m)
    probs = e / jnp.sum(e, axis=-1, keepdims=True)            # exact per-row divide
    o_ref[...] = probs.astype(o_ref.dtype)                    # bf16 lane-dense store


def prepare_params(params):
    """Zero-pad to lane-aligned widths; weights -> bf16, biases stay f32.

    Call ONCE at init and reuse the result: doing this per forward re-launches
    pad/cast passes over ~300 KB of weights every call.
    """
    def pad_w(w, rows, cols):
        out = jnp.zeros((rows, cols), jnp.float32)
        return out.at[: w.shape[0], : w.shape[1]].set(w).astype(jnp.bfloat16)

    def pad_b(b, cols):
        out = jnp.zeros((1, cols), jnp.float32)
        return out.at[:, : b.shape[1]].set(b)

    return dict(
        w1=pad_w(params["w1"], IN_DIM, H1_PAD), b1=pad_b(params["b1"], H1_PAD),
        w2=pad_w(params["w2"], H1_PAD, H2_PAD), b2=pad_b(params["b2"], H2_PAD),
        w3=pad_w(params["w3"], H2_PAD, OUT_PAD), b3=pad_b(params["b3"], OUT_PAD),
    )


def _pick_tile(B, tb):
    """Batch-tile selection.

    - bf16 operands pack 16 rows per sublane group, so round to multiples of 16.
    - Single-TC chips (v5e/v6e): bigger tiles are strictly better (fewer
      ~0.35 us grid steps), hence the large default.
    - v7x (2 TCs): make sure there are >=2 grid steps at moderate batch sizes
      so dimension_semantics=("parallel",) can shard the batch across cores.
    """
    full = _round_up(max(B, 16), 16)
    tb = min(tb, full)
    if full <= tb and B >= 64:          # would be a single tile -> split into 2
        tb = _round_up(-(-B // 2), 16)
    return tb


@functools.partial(jax.jit, static_argnames=("tb",))
def simple_nn_forward(x, padded_params, *, tb=512):
    """x: (B, 64) float32. padded_params: output of prepare_params()."""
    p = padded_params
    B = x.shape[0]
    tb = _pick_tile(B, tb)
    b_pad = _round_up(B, tb)
    if b_pad != B:
        # Cheap, only touches the (rare) ragged tail tile.
        x = jnp.pad(x, ((0, b_pad - B), (0, 0)))
    grid = (b_pad // tb,)

    # Weights/biases: same block every grid step -> fetched once, VMEM-resident.
    # TODO(synk): pipeline_mode=pl.Buffered(1) would drop their redundant second
    # buffer (~300 KiB VMEM); omitted here as it is a negligible win at this size.
    resident = lambda shape: pl.BlockSpec(shape, lambda i: (0, 0))

    flops = 2 * b_pad * (IN_DIM * H1_PAD + H1_PAD * H2_PAD + H2_PAD * OUT_PAD)
    transcendentals = b_pad * (H1_PAD + H2_PAD + OUT_PAD)
    bytes_accessed = (b_pad * IN_DIM * 4 + b_pad * OUT_PAD * 2
                      + sum(int(v.size) * v.dtype.itemsize for v in p.values()))

    out = pl.pallas_call(
        _mlp_kernel,
        out_shape=jax.ShapeDtypeStruct((b_pad, OUT_PAD), jnp.bfloat16),
        grid=grid,
        in_specs=[
            pl.BlockSpec((tb, IN_DIM), lambda i: (i, 0)),        # x: batch-tiled, f32
            resident((IN_DIM, H1_PAD)), resident((1, H1_PAD)),
            resident((H1_PAD, H2_PAD)), resident((1, H2_PAD)),
            resident((H2_PAD, OUT_PAD)), resident((1, OUT_PAD)),
        ],
        out_specs=pl.BlockSpec((tb, OUT_PAD), lambda i: (i, 0)),  # lane-dense store
        compiler_params=pltpu.CompilerParams(
            dimension_semantics=("parallel",),   # batch tiles independent (v7x 2-TC)
            vmem_limit_bytes=32 << 20,           # safe on v7x's 64 MiB physical
        ),
        cost_estimate=pl.CostEstimate(
            flops=flops,
            transcendentals=transcendentals,
            bytes_accessed=bytes_accessed,
        ),
    )(x, p["w1"], p["b1"], p["w2"], p["b2"], p["w3"], p["b3"])

    # Padded batch rows / 118 padded class columns hold garbage -> always slice.
    return out[:B, :OUT_DIM].astype(jnp.float32)


def init_params(key):
    """Deterministic xavier_uniform weights + 0.01 biases (matches init_kaiming)."""
    def xavier(key, fan_in, fan_out):
        a = jnp.sqrt(6.0 / (fan_in + fan_out))
        return jax.random.uniform(key, (fan_in, fan_out), jnp.float32, -a, a)

    k1, k2, k3 = jax.random.split(key, 3)
    return {
        "w1": xavier(k1, IN_DIM, H1),
        "b1": jnp.full((1, H1), 0.01, jnp.float32),
        "w2": xavier(k2, H1, H2),
        "b2": jnp.full((1, H2), 0.01, jnp.float32),
        "w3": xavier(k3, H2, OUT_DIM),
        "b3": jnp.full((1, OUT_DIM), 0.01, jnp.float32),
    }


if __name__ == "__main__":
    key = jax.random.PRNGKey(0)
    k_x, k_p = jax.random.split(key)

    B = 8
    # Inputs shaped like load_digits rows: (B, 64), values in [0, 16].
    x = jax.random.uniform(k_x, (B, IN_DIM), jnp.float32, 0.0, 16.0)
    params = init_params(k_p)
    padded = prepare_params(params)           # done once, reused every forward

    out = jax.block_until_ready(simple_nn_forward(x, padded))

    # Sanity: shape and softmax rows sum to ~1 (bf16 output rounding only).
    assert out.shape == (B, OUT_DIM)
    assert jnp.allclose(jnp.sum(out, axis=-1), 1.0, atol=1e-2)

    # Cross-check against pure-f32 JAX reference; bf16 matmuls + bf16 output
    # storage set the tolerance.
    def ref(x, p):
        h1 = jax.nn.sigmoid(x @ p["w1"] + p["b1"])
        h2 = jax.nn.sigmoid(h1 @ p["w2"] + p["b2"])
        return jax.nn.softmax(h2 @ p["w3"] + p["b3"], axis=-1)

    assert jnp.allclose(out, ref(x, params), atol=3e-2)
    print("KERNEL_OK")
</pallas_src>

<mosaic_0001>
module attributes {stable_mosaic.version = 11 : i64} {
  func.func @_mlp_kernel(%arg0: i32, %arg1: memref<16x64xf32, #tpu.memory_space<vmem>>, %arg2: memref<64x384xbf16, #tpu.memory_space<vmem>>, %arg3: memref<1x384xf32, #tpu.memory_space<vmem>>, %arg4: memref<384x256xbf16, #tpu.memory_space<vmem>>, %arg5: memref<1x256xf32, #tpu.memory_space<vmem>>, %arg6: memref<256x128xbf16, #tpu.memory_space<vmem>>, %arg7: memref<1x128xf32, #tpu.memory_space<vmem>>, %arg8: memref<16x128xbf16, #tpu.memory_space<vmem>>) attributes {dimension_semantics = [#tpu.dimension_semantics<parallel>], iteration_bounds = array<i64: 1>, scalar_prefetch = 0 : i64, scratch_operands = 0 : i64, tpu.core_type = #tpu.core_type<tc>, window_params = [{transform_indices = @transform_0, window_bounds = array<i64: 16, 64>}, {pipeline_mode = #tpu.pipeline_mode<synchronous>, transform_indices = @transform_1, window_bounds = array<i64: 64, 384>}, {pipeline_mode = #tpu.pipeline_mode<synchronous>, transform_indices = @transform_2, window_bounds = array<i64: 1, 384>}, {pipeline_mode = #tpu.pipeline_mode<synchronous>, transform_indices = @transform_3, window_bounds = array<i64: 384, 256>}, {pipeline_mode = #tpu.pipeline_mode<synchronous>, transform_indices = @transform_4, window_bounds = array<i64: 1, 256>}, {pipeline_mode = #tpu.pipeline_mode<synchronous>, transform_indices = @transform_5, window_bounds = array<i64: 256, 128>}, {pipeline_mode = #tpu.pipeline_mode<synchronous>, transform_indices = @transform_6, window_bounds = array<i64: 1, 128>}, {transform_indices = @transform_7, window_bounds = array<i64: 16, 128>}]} {
    %c0 = arith.constant 0 : index
    %c0_0 = arith.constant 0 : index
    %0 = vector.load %arg1[%c0, %c0_0] : memref<16x64xf32, #tpu.memory_space<vmem>>, vector<16x64xf32>
    %1 = arith.truncf %0 : vector<16x64xf32> to vector<16x64xbf16>
    %c0_1 = arith.constant 0 : index
    %c0_2 = arith.constant 0 : index
    %2 = vector.load %arg2[%c0_1, %c0_2] : memref<64x384xbf16, #tpu.memory_space<vmem>>, vector<64x384xbf16>
    %cst = arith.constant dense<0.000000e+00> : vector<16x384xf32>
    %3 = tpu.matmul %1, %2, %cst {dimension_numbers = #tpu.dot_dimension_numbers<[1], [0], [0], [1], [0, 0, 1, 1], [], []>} : vector<16x64xbf16>, vector<64x384xbf16>, vector<16x384xf32> -> vector<16x384xf32>
    %c0_3 = arith.constant 0 : index
    %c0_4 = arith.constant 0 : index
    %4 = vector.load %arg3[%c0_3, %c0_4] : memref<1x384xf32, #tpu.memory_space<vmem>>, vector<1x384xf32>
    %5 = vector.broadcast %4 : vector<1x384xf32> to vector<16x384xf32>
    %6 = arith.addf %3, %5 : vector<16x384xf32>
    %cst_5 = arith.constant 5.000000e-01 : f32
    %7 = vector.broadcast %cst_5 : f32 to vector<16x384xf32>
    %8 = arith.mulf %7, %6 : vector<16x384xf32>
    %9 = math.tanh %8 : vector<16x384xf32>
    %cst_6 = arith.constant 5.000000e-01 : f32
    %10 = vector.broadcast %cst_6 : f32 to vector<16x384xf32>
    %11 = arith.mulf %10, %9 : vector<16x384xf32>
    %cst_7 = arith.constant 5.000000e-01 : f32
    %12 = vector.broadcast %cst_7 : f32 to vector<16x384xf32>
    %13 = arith.addf %11, %12 : vector<16x384xf32>
    %14 = arith.truncf %13 : vector<16x384xf32> to vector<16x384xbf16>
    %c0_8 = arith.constant 0 : index
    %c0_9 = arith.constant 0 : index
    %15 = vector.load %arg4[%c0_8, %c0_9] : memref<384x256xbf16, #tpu.memory_space<vmem>>, vector<384x256xbf16>
    %cst_10 = arith.constant dense<0.000000e+00> : vector<16x256xf32>
    %16 = tpu.matmul %14, %15, %cst_10 {dimension_numbers = #tpu.dot_dimension_numbers<[1], [0], [0], [1], [0, 0, 1, 1], [], []>} : vector<16x384xbf16>, vector<384x256xbf16>, vector<16x256xf32> -> vector<16x256xf32>
    %c0_11 = arith.constant 0 : index
    %c0_12 = arith.constant 0 : index
    %17 = vector.load %arg5[%c0_11, %c0_12] : memref<1x256xf32, #tpu.memory_space<vmem>>, vector<1x256xf32>
    %18 = vector.broadcast %17 : vector<1x256xf32> to vector<16x256xf32>
    %19 = arith.addf %16, %18 : vector<16x256xf32>
    %cst_13 = arith.constant 5.000000e-01 : f32
    %20 = vector.broadcast %cst_13 : f32 to vector<16x256xf32>
    %21 = arith.mulf %20, %19 : vector<16x256xf32>
    %22 = math.tanh %21 : vector<16x256xf32>
    %cst_14 = arith.constant 5.000000e-01 : f32
    %23 = vector.broadcast %cst_14 : f32 to vector<16x256xf32>
    %24 = arith.mulf %23, %22 : vector<16x256xf32>
    %cst_15 = arith.constant 5.000000e-01 : f32
    %25 = vector.broadcast %cst_15 : f32 to vector<16x256xf32>
    %26 = arith.addf %24, %25 : vector<16x256xf32>
    %27 = arith.truncf %26 : vector<16x256xf32> to vector<16x256xbf16>
    %c0_16 = arith.constant 0 : index
    %c0_17 = arith.constant 0 : index
    %28 = vector.load %arg6[%c0_16, %c0_17] : memref<256x128xbf16, #tpu.memory_space<vmem>>, vector<256x128xbf16>
    %cst_18 = arith.constant dense<0.000000e+00> : vector<16x128xf32>
    %29 = tpu.matmul %27, %28, %cst_18 {dimension_numbers = #tpu.dot_dimension_numbers<[1], [0], [0], [1], [0, 0, 1, 1], [], []>} : vector<16x256xbf16>, vector<256x128xbf16>, vector<16x128xf32> -> vector<16x128xf32>
    %c0_19 = arith.constant 0 : index
    %c0_20 = arith.constant 0 : index
    %30 = vector.load %arg7[%c0_19, %c0_20] : memref<1x128xf32, #tpu.memory_space<vmem>>, vector<1x128xf32>
    %31 = vector.broadcast %30 : vector<1x128xf32> to vector<16x128xf32>
    %32 = arith.addf %29, %31 : vector<16x128xf32>
    %33 = tpu.iota {dimensions = array<i32: 1>} : vector<16x128xi32>
    %c10_i32 = arith.constant 10 : i32
    %34 = vector.broadcast %c10_i32 : i32 to vector<16x128xi32>
    %35 = arith.cmpi slt, %33, %34 : vector<16x128xi32>
    %cst_21 = arith.constant -1.000000e+30 : f32
    %36 = vector.broadcast %cst_21 : f32 to vector<16x128xf32>
    %37 = arith.select %35, %32, %36 : vector<16x128xi1>, vector<16x128xf32>
    %cst_22 = arith.constant dense<0xFF800000> : vector<16xf32>
    %38 = vector.multi_reduction <maximumf>, %37, %cst_22 [1] : vector<16x128xf32> to vector<16xf32>
    %39 = vector.shape_cast %38 : vector<16xf32> to vector<16x1xf32>
    %40 = vector.broadcast %39 : vector<16x1xf32> to vector<16x128xf32>
    %41 = arith.subf %37, %40 : vector<16x128xf32>
    %42 = math.exp %41 : vector<16x128xf32>
    %cst_23 = arith.constant dense<0.000000e+00> : vector<16xf32>
    %43 = vector.multi_reduction <add>, %42, %cst_23 [1] : vector<16x128xf32> to vector<16xf32>
    %44 = vector.shape_cast %43 : vector<16xf32> to vector<16x1xf32>
    %45 = vector.broadcast %44 : vector<16x1xf32> to vector<16x128xf32>
    %46 = arith.divf %42, %45 : vector<16x128xf32>
    %47 = arith.truncf %46 : vector<16x128xf32> to vector<16x128xbf16>
    %c0_24 = arith.constant 0 : index
    %c0_25 = arith.constant 0 : index
    %48 = vector.load %arg8[%c0_24, %c0_25] : memref<16x128xbf16, #tpu.memory_space<vmem>>, vector<16x128xbf16>
    tpu.vector_store %arg8[%c0_24, %c0_25], %47 {strides = array<i32>} : memref<16x128xbf16, #tpu.memory_space<vmem>>, vector<16x128xbf16>,
    return
  }
  func.func @transform_0(%arg0: i32) -> (i32, i32) {
    %c0_i32 = arith.constant 0 : i32
    %c0_i32_0 = arith.constant 0 : i32
    return %arg0, %c0_i32 : i32, i32
  }
  func.func @transform_1(%arg0: i32) -> (i32, i32) {
    %c0_i32 = arith.constant 0 : i32
    %c0_i32_0 = arith.constant 0 : i32
    %c0_i32_1 = arith.constant 0 : i32
    return %c0_i32, %c0_i32_0 : i32, i32
  }
  func.func @transform_2(%arg0: i32) -> (i32, i32) {
    %c0_i32 = arith.constant 0 : i32
    %c0_i32_0 = arith.constant 0 : i32
    %c0_i32_1 = arith.constant 0 : i32
    return %c0_i32, %c0_i32_0 : i32, i32
  }
  func.func @transform_3(%arg0: i32) -> (i32, i32) {
    %c0_i32 = arith.constant 0 : i32
    %c0_i32_0 = arith.constant 0 : i32
    %c0_i32_1 = arith.constant 0 : i32
    return %c0_i32, %c0_i32_0 : i32, i32
  }
  func.func @transform_4(%arg0: i32) -> (i32, i32) {
    %c0_i32 = arith.constant 0 : i32
    %c0_i32_0 = arith.constant 0 : i32
    %c0_i32_1 = arith.constant 0 : i32
    return %c0_i32, %c0_i32_0 : i32, i32
  }
  func.func @transform_5(%arg0: i32) -> (i32, i32) {
    %c0_i32 = arith.constant 0 : i32
    %c0_i32_0 = arith.constant 0 : i32
    %c0_i32_1 = arith.constant 0 : i32
    return %c0_i32, %c0_i32_0 : i32, i32
  }
  func.func @transform_6(%arg0: i32) -> (i32, i32) {
    %c0_i32 = arith.constant 0 : i32
    %c0_i32_0 = arith.constant 0 : i32
    %c0_i32_1 = arith.constant 0 : i32
    return %c0_i32, %c0_i32_0 : i32, i32
  }
  func.func @transform_7(%arg0: i32) -> (i32, i32) {
    %c0_i32 = arith.constant 0 : i32
    %c0_i32_0 = arith.constant 0 : i32
    return %arg0, %c0_i32 : i32, i32
  }
}

</mosaic_0001>

<llo_original>
// kernel: simple_nn_forward.1
$region0: #{simple_nn_forward.1}
  #allocation0 [shape = 'u32[]', space=smem, size = 0x4, offset = 0x4, fixed_abs, tag = 'smem constant byte address 0x4 - core index']
  #allocation1 [shape = 'u32[144,128]{1,0:T(1,128)}', space=vmem, size = 0x12000, scoped, tag = 'internal scratch']
  %s0 = inlined_call_operand.vmem [shape: f32[16,64], index: 0, kind: input, shape index: {}]
  %s1 = inlined_call_operand.hbm [shape: bf16[64,384], index: 1, kind: input, shape index: {}]
  %s2 = inlined_call_operand.vmem [shape: f32[1,384], index: 2, kind: input, shape index: {}]
  %s3 = inlined_call_operand.hbm [shape: bf16[384,256], index: 3, kind: input, shape index: {}]
  %s4 = inlined_call_operand.vmem [shape: f32[1,256], index: 4, kind: input, shape index: {}]
  %s5 = inlined_call_operand.hbm [shape: bf16[256,128], index: 5, kind: input, shape index: {}]
  %s6 = inlined_call_operand.vmem [shape: f32[1,128], index: 6, kind: input, shape index: {}]
  %s7 = inlined_call_operand.vmem [shape: bf16[16,128], index: 7, kind: output, shape index: {}]
  %s8 = sld [smem:[#allocation0]]
  $region50: #{simple_nn_forward.1} parent=0
    _
  %s10 = ssub.s32 1, %s8
  %s11 = scalar_select 0, %s10, %s8
  $region1: #{simple_nn_forward.1} parent=0
    #allocation2 [shape = 'u8[49152]{0}', space=vmem, size = 0xc000, scoped, tag = 'input window, operand 1, single buffered']
    #allocation3 [shape = 's32[1]{0}', space=sflag, size = 0x4, scoped, tag = 'scoped memory for simple_nn_forward.1']
    #allocation4 [shape = 'u8[196608]{0}', space=vmem, size = 0x30000, scoped, tag = 'input window, operand 3, single buffered']
    #allocation5 [shape = 's32[1]{0}', space=sflag, size = 0x4, scoped, tag = 'scoped memory for simple_nn_forward.1']
    #allocation6 [shape = 'u8[65536]{0}', space=vmem, size = 0x10000, scoped, tag = 'input window, operand 5, single buffered']
    %12 = vsyncpa [#allocation3], 0
    %13 = vsyncpa [#allocation5], 0
    // Predicated region
    $region2: #{simple_nn_forward.1} parent=1 // pred_check
      _
    $region3: #{simple_nn_forward.1} parent=1 // pred_check_branch
      %15 = sbr.rel (0) target = $region5
    $region4: #{simple_nn_forward.1} parent=1 // pred_region
      _
    $region5: #{simple_nn_forward.1} parent=1 // pred_fallthru
      _
    // Predicated region
    $region6: #{simple_nn_forward.1} parent=1 // pred_check
      _
    $region7: #{simple_nn_forward.1} parent=1 // pred_check_branch
      %17 = sbr.rel (0) target = $region9
    $region8: #{simple_nn_forward.1} parent=1 // pred_region
      %s19 = ssub.s32 1536, 1536
      %20 = vsyncadd [#allocation3], %s19
      %s21 = sshll.u32 [#allocation2], 4
      %s22 = int_to_ptr.vmem [resolvable:$true] %s21
      %27 = dma.hbm_to_vmem [thread:$0]  %s1, 1536, %s22, [#allocation3], 192, 192, 12
    $region9: #{simple_nn_forward.1} parent=1 // pred_fallthru
      _
    // Predicated region
    $region10: #{simple_nn_forward.1} parent=1 // pred_check
      _
    $region11: #{simple_nn_forward.1} parent=1 // pred_check_branch
      %29 = sbr.rel (0) target = $region13
    $region12: #{simple_nn_forward.1} parent=1 // pred_region
      _
    $region13: #{simple_nn_forward.1} parent=1 // pred_fallthru
      _
    // Predicated region
    $region14: #{simple_nn_forward.1} parent=1 // pred_check
      _
    $region15: #{simple_nn_forward.1} parent=1 // pred_check_branch
      %31 = sbr.rel (0) target = $region17
    $region16: #{simple_nn_forward.1} parent=1 // pred_region
      %s33 = ssub.s32 6144, 6144
      %34 = vsyncadd [#allocation5], %s33
      %s35 = sshll.u32 [#allocation4], 4
      %s36 = int_to_ptr.vmem [resolvable:$true] %s35
      %41 = dma.hbm_to_vmem [thread:$0]  %s3, 6144, %s36, [#allocation5], 128, 128, 8
    $region17: #{simple_nn_forward.1} parent=1 // pred_fallthru
      _
    // Predicated region
    $region18: #{simple_nn_forward.1} parent=1 // pred_check
      _
    $region19: #{simple_nn_forward.1} parent=1 // pred_check_branch
      %43 = sbr.rel (0) target = $region21
    $region20: #{simple_nn_forward.1} parent=1 // pred_region
      _
    $region21: #{simple_nn_forward.1} parent=1 // pred_fallthru
      _
    // Predicated region
    $region22: #{simple_nn_forward.1} parent=1 // pred_check
      _
    $region23: #{simple_nn_forward.1} parent=1 // pred_check_branch
      %45 = sbr.rel (0) target = $region25
    $region24: #{simple_nn_forward.1} parent=1 // pred_region
      %s47 = ssub.s32 2048, 2048
      %48 = vsyncadd [#allocation5], %s47
      %s49 = sshll.u32 [#allocation6], 4
      %s50 = int_to_ptr.vmem [resolvable:$true] %s49
      %55 = dma.hbm_to_vmem [thread:$0]  %s5, 2048, %s50, [#allocation5], 64, 64, 4
    $region25: #{simple_nn_forward.1} parent=1 // pred_fallthru
      _
    // Predicated region
    $region26: #{simple_nn_forward.1} parent=1 // pred_check
      _
    $region27: #{simple_nn_forward.1} parent=1 // pred_check_branch
      %57 = sbr.rel (0) target = $region29
    $region28: #{simple_nn_forward.1} parent=1 // pred_region
      _
    $region29: #{simple_nn_forward.1} parent=1 // pred_fallthru
      _
    // Predicated region
    $region30: #{simple_nn_forward.1} parent=1 // pred_check
      _
    $region31: #{simple_nn_forward.1} parent=1 // pred_check_branch
      %59 = sbr.rel (0) target = $region33
    $region32: #{simple_nn_forward.1} parent=1 // pred_region
      %60 = dma.done [#allocation3], 1536
    $region33: #{simple_nn_forward.1} parent=1 // pred_fallthru
      _
    // Predicated region
    $region34: #{simple_nn_forward.1} parent=1 // pred_check
      _
    $region35: #{simple_nn_forward.1} parent=1 // pred_check_branch
      %62 = sbr.rel (0) target = $region37
    $region36: #{simple_nn_forward.1} parent=1 // pred_region
      %63 = dma.done [#allocation5], 6144
    $region37: #{simple_nn_forward.1} parent=1 // pred_fallthru
      _
    // Predicated region
    $region38: #{simple_nn_forward.1} parent=1 // pred_check
      _
    $region39: #{simple_nn_forward.1} parent=1 // pred_check_branch
      %65 = sbr.rel (0) target = $region41
    $region40: #{simple_nn_forward.1} parent=1 // pred_region
      %66 = dma.done [#allocation5], 2048
    $region41: #{simple_nn_forward.1} parent=1 // pred_fallthru
      _
    %v68 = vld [vmem:[%s0] sm:$0xff]
    %v69 = vld [vmem:[%s0 + $0x8] sm:$0xff]
    %v70 = vpack.c.bf16 %v69, %v68
    %v71 = vld [vmem:[#allocation2] sm:$0xff]
    %v72 = vld [vmem:[#allocation2 + $0x8] sm:$0xf]
    %v73 = vld [vmem:[#allocation2 + $0xc] sm:$0xff]
    %v74 = vld [vmem:[#allocation2 + $0x14] sm:$0xf]
    %v75 = vld [vmem:[#allocation2 + $0x18] sm:$0xff]
    %v76 = vld [vmem:[#allocation2 + $0x20] sm:$0xf]
    %v77 = vld [vmem:[#allocation2 + $0x24] sm:$0xff]
    %v78 = vld [vmem:[#allocation2 + $0x2c] sm:$0xf]
    %v79 = vld [vmem:[#allocation2 + $0x30] sm:$0xff]
    %v80 = vld [vmem:[#allocation2 + $0x38] sm:$0xf]
    %v81 = vld [vmem:[#allocation2 + $0x3c] sm:$0xff]
    %v82 = vld [vmem:[#allocation2 + $0x44] sm:$0xf]
    %v83 = vld [vmem:[#allocation2 + $0x48] sm:$0xff]
    %v84 = vld [vmem:[#allocation2 + $0x50] sm:$0xf]
    %v85 = vld [vmem:[#allocation2 + $0x54] sm:$0xff]
    %v86 = vld [vmem:[#allocation2 + $0x5c] sm:$0xf]
    %v87 = vld [vmem:[%s2] sm:$0x7]
    %v89 = vlaneseq
    %v90 = vshrl.u32 %v89, 7
    %v91 = vsub.s32 0, %v90
    %v92 = vrot.slane %v87, %v91
    %v93 = vlaneseq
    %v94 = vshrl.u32 %v93, 7
    %v95 = vsub.s32 1, %v94
    %v96 = vrot.slane %v87, %v95
    %v97 = vlaneseq
    %v98 = vshrl.u32 %v97, 7
    %v99 = vsub.s32 2, %v98
    %v100 = vrot.slane %v87, %v99
    %v120 = vunpack.c.l.b16 %v71
    %v121 = vunpack.c.h.b16 %v71
    %v122 = vunpack.c.l.b16 %v72
    %v123 = vunpack.c.l.b16 %v73
    %v124 = vunpack.c.h.b16 %v73
    %v125 = vunpack.c.l.b16 %v74
    %v126 = vunpack.c.l.b16 %v75
    %v127 = vunpack.c.h.b16 %v75
    %v128 = vunpack.c.l.b16 %v76
    %v129 = vunpack.c.l.b16 %v77
    %v130 = vunpack.c.h.b16 %v77
    %v131 = vunpack.c.l.b16 %v78
    %v132 = vunpack.c.l.b16 %v79
    %v133 = vunpack.c.h.b16 %v79
    %v134 = vunpack.c.l.b16 %v80
    %v135 = vunpack.c.l.b16 %v81
    %v136 = vunpack.c.h.b16 %v81
    %v137 = vunpack.c.l.b16 %v82
    %v138 = vunpack.c.l.b16 %v83
    %v139 = vunpack.c.h.b16 %v83
    %v140 = vunpack.c.l.b16 %v84
    %v141 = vunpack.c.l.b16 %v85
    %v142 = vunpack.c.h.b16 %v85
    %v143 = vunpack.c.l.b16 %v86
    %v144 = vpack.c.b16 %v123, %v120
    %v145 = vpack.c.b16 %v124, %v121
    %v146 = vpack.c.b16 %v125, %v122
    %v147 = vpack.c.b16 %v129, %v126
    %v148 = vpack.c.b16 %v130, %v127
    %v149 = vpack.c.b16 %v131, %v128
    %v150 = vpack.c.b16 %v135, %v132
    %v151 = vpack.c.b16 %v136, %v133
    %v152 = vpack.c.b16 %v137, %v134
    %v153 = vpack.c.b16 %v141, %v138
    %v154 = vpack.c.b16 %v142, %v139
    %v155 = vpack.c.b16 %v143, %v140
    %vm168 = vcmask 523264
    %v170 = vsel %vm168, %v70, 0
    %172 = vmatprep.subr.bf16.mxu0 %v145
    %173 = vmatpush1.bf16.msra.mxu0 %v144
    %174 = vmatprep.subr.bf16.mxu0 %v148
    %175 = vmatpush1.bf16.msra.mxu0 %v147
    %176 = vmatprep.subr.bf16.mxu0 %v151
    %177 = vmatpush1.bf16.msra.mxu0 %v150
    %178 = vmatprep.subr.bf16.mxu0 %v154
    %179 = vmatpush1.bf16.msra.mxu0 %v153
    %180 = vmatprep.subr.bf16.mxu0 0
    %181 = vmatpush1.bf16.msra.mxu0 0
    %182 = vmatprep.subr.bf16.mxu0 0
    %183 = vmatpush1.bf16.msra.mxu0 0
    %184 = vmatprep.subr.bf16.mxu0 0
    %185 = vmatpush1.bf16.msra.mxu0 0
    %186 = vmatprep.subr.bf16.mxu0 0
    %187 = vmatpush1.bf16.msra.mxu0 0
    %188 = vmatprep.subr.bf16.mxu0 0
    %189 = vmatpush1.bf16.msra.mxu0 0
    %190 = vmatprep.subr.bf16.mxu0 0
    %191 = vmatpush1.bf16.msra.mxu0 0
    %192 = vmatprep.subr.bf16.mxu0 0
    %193 = vmatpush1.bf16.msra.mxu0 0
    %194 = vmatprep.subr.bf16.mxu0 0
    %195 = vmatpush1.bf16.msra.mxu0 0
    %196 = vmatprep.subr.bf16.mxu0 0
    %197 = vmatpush1.bf16.msra.mxu0 0
    %198 = vmatprep.subr.bf16.mxu0 0
    %199 = vmatpush1.bf16.msra.mxu0 0
    %200 = vmatprep.subr.bf16.mxu0 0
    %201 = vmatpush1.bf16.msra.mxu0 0
    %202 = vmatprep.subr.bf16.mxu0 0
    %203 = vmatpush1.bf16.msra.mxu0 0
    %204 = vmatprep.mubr.bf16.mxu0 0
    %205 = vmatmul.mubr.bf16.gmra.mrb[0].mxu0 %v170
    %v206 = vpop.f32.mrb[0].mxu0
    %v207 = vadd.f32 %v92, %v206
    %v208 = vpop.f32.mrb[0].mxu0
    %v209 = vadd.f32 %v96, %v208
    %v210 = vpop.f32.mrb[0].mxu0
    %v211 = vadd.f32 %v92, %v210
    %v212 = vpop.f32.mrb[0].mxu0
    %v213 = vadd.f32 %v96, %v212
    %214 = vdwg.mxu0
    %215 = vmatprep.subr.bf16.mxu0 0
    %216 = vmatpush1.bf16.msra.mxu0 %v146
    %217 = vmatprep.subr.bf16.mxu0 0
    %218 = vmatpush1.bf16.msra.mxu0 %v149
    %219 = vmatprep.subr.bf16.mxu0 0
    %220 = vmatpush1.bf16.msra.mxu0 %v152
    %221 = vmatprep.subr.bf16.mxu0 0
    %222 = vmatpush1.bf16.msra.mxu0 %v155
    %223 = vmatprep.subr.bf16.mxu0 0
    %224 = vmatpush1.bf16.msra.mxu0 0
    %225 = vmatprep.subr.bf16.mxu0 0
    %226 = vmatpush1.bf16.msra.mxu0 0
    %227 = vmatprep.subr.bf16.mxu0 0
    %228 = vmatpush1.bf16.msra.mxu0 0
    %229 = vmatprep.subr.bf16.mxu0 0
    %230 = vmatpush1.bf16.msra.mxu0 0
    %231 = vmatprep.subr.bf16.mxu0 0
    %232 = vmatpush1.bf16.msra.mxu0 0
    %233 = vmatprep.subr.bf16.mxu0 0
    %234 = vmatpush1.bf16.msra.mxu0 0
    %235 = vmatprep.subr.bf16.mxu0 0
    %236 = vmatpush1.bf16.msra.mxu0 0
    %237 = vmatprep.subr.bf16.mxu0 0
    %238 = vmatpush1.bf16.msra.mxu0 0
    %239 = vmatprep.subr.bf16.mxu0 0
    %240 = vmatpush1.bf16.msra.mxu0 0
    %241 = vmatprep.subr.bf16.mxu0 0
    %242 = vmatpush1.bf16.msra.mxu0 0
    %243 = vmatprep.subr.bf16.mxu0 0
    %244 = vmatpush1.bf16.msra.mxu0 0
    %245 = vmatprep.subr.bf16.mxu0 0
    %246 = vmatpush1.bf16.msra.mxu0 0
    %247 = vmatprep.mubr.bf16.mxu0 0
    %248 = vmatmul.mubr.bf16.gmra.mrb[0].mxu0 %v170
    %v249 = vpop.f32.mrb[0].mxu0
    %v250 = vadd.f32 %v100, %v249
    %v251 = vpop.f32.mrb[0].mxu0
    %v252 = vpop.f32.mrb[0].mxu0
    %v253 = vadd.f32 %v100, %v252
    %v254 = vpop.f32.mrb[0].mxu0
    %255 = vdwg.mxu0
    %v256 = vmul.f32 %v207, 0.5
    %v257 = vmul.f32 %v209, 0.5
    %v258 = vmul.f32 %v250, 0.5
    %v259 = vmul.f32 %v211, 0.5
    %v260 = vmul.f32 %v213, 0.5
    %v261 = vmul.f32 %v253, 0.5
    %v262 = vtanh.pop %v256
    %v263 = vtanh.pop %v257
    %v264 = vtanh.pop %v258
    %v265 = vtanh.pop %v259
    %v266 = vtanh.pop %v260
    %v267 = vtanh.pop %v261
    %v268 = vmul.f32 %v262, 0.5
    %v269 = vmul.f32 %v263, 0.5
    %v270 = vmul.f32 %v264, 0.5
    %v271 = vmul.f32 %v265, 0.5
    %v272 = vmul.f32 %v266, 0.5
    %v273 = vmul.f32 %v267, 0.5
    %v274 = vadd.f32 %v268, 0.5
    %v275 = vadd.f32 %v269, 0.5
    %v276 = vadd.f32 %v270, 0.5
    %v277 = vadd.f32 %v271, 0.5
    %v278 = vadd.f32 %v272, 0.5
    %v279 = vadd.f32 %v273, 0.5
    %v280 = vpack.c.bf16 %v277, %v274
    %v281 = vpack.c.bf16 %v278, %v275
    %v282 = vpack.c.bf16 %v279, %v276
    %v283 = vld [vmem:[#allocation4] sm:$0xff]
    %v284 = vld [vmem:[#allocation4 + $0x8] sm:$0xff]
    %v285 = vld [vmem:[#allocation4 + $0x10] sm:$0xff]
    %v286 = vld [vmem:[#allocation4 + $0x18] sm:$0xff]
    %v287 = vld [vmem:[#allocation4 + $0x20] sm:$0xff]
    %v288 = vld [vmem:[#allocation4 + $0x28] sm:$0xff]
    %v289 = vld [vmem:[#allocation4 + $0x30] sm:$0xff]
    %v290 = vld [vmem:[#allocation4 + $0x38] sm:$0xff]
    %v291 = vld [vmem:[#allocation4 + $0x40] sm:$0xff]
    %v292 = vld [vmem:[#allocation4 + $0x48] sm:$0xff]
    %v293 = vld [vmem:[#allocation4 + $0x50] sm:$0xff]
    %v294 = vld [vmem:[#allocation4 + $0x58] sm:$0xff]
    %v295 = vld [vmem:[#allocation4 + $0x60] sm:$0xff]
    %v296 = vld [vmem:[#allocation4 + $0x68] sm:$0xff]
    %v297 = vld [vmem:[#allocation4 + $0x70] sm:$0xff]
    %v298 = vld [vmem:[#allocation4 + $0x78] sm:$0xff]
    %v299 = vld [vmem:[#allocation4 + $0x80] sm:$0xff]
    %v300 = vld [vmem:[#allocation4 + $0x88] sm:$0xff]
    %v301 = vld [vmem:[#allocation4 + $0x90] sm:$0xff]
    %v302 = vld [vmem:[#allocation4 + $0x98] sm:$0xff]
    %v303 = vld [vmem:[#allocation4 + $0xa0] sm:$0xff]
    %v304 = vld [vmem:[#allocation4 + $0xa8] sm:$0xff]
    %v305 = vld [vmem:[#allocation4 + $0xb0] sm:$0xff]
    %v306 = vld [vmem:[#allocation4 + $0xb8] sm:$0xff]
    %v307 = vld [vmem:[#allocation4 + $0xc0] sm:$0xff]
    %v308 = vld [vmem:[#allocation4 + $0xc8] sm:$0xff]
    %v309 = vld [vmem:[#allocation4 + $0xd0] sm:$0xff]
    %v310 = vld [vmem:[#allocation4 + $0xd8] sm:$0xff]
    %v311 = vld [vmem:[#allocation4 + $0xe0] sm:$0xff]
    %v312 = vld [vmem:[#allocation4 + $0xe8] sm:$0xff]
    %v313 = vld [vmem:[#allocation4 + $0xf0] sm:$0xff]
    %v314 = vld [vmem:[#allocation4 + $0xf8] sm:$0xff]
    %v315 = vld [vmem:[#allocation4 + $0x100] sm:$0xff]
    %v316 = vld [vmem:[#allocation4 + $0x108] sm:$0xff]
    %v317 = vld [vmem:[#allocation4 + $0x110] sm:$0xff]
    %v318 = vld [vmem:[#allocation4 + $0x118] sm:$0xff]
    %v319 = vld [vmem:[#allocation4 + $0x120] sm:$0xff]
    %v320 = vld [vmem:[#allocation4 + $0x128] sm:$0xff]
    %v321 = vld [vmem:[#allocation4 + $0x130] sm:$0xff]
    %v322 = vld [vmem:[#allocation4 + $0x138] sm:$0xff]
    %v323 = vld [vmem:[#allocation4 + $0x140] sm:$0xff]
    %v324 = vld [vmem:[#allocation4 + $0x148] sm:$0xff]
    %v325 = vld [vmem:[#allocation4 + $0x150] sm:$0xff]
    %v326 = vld [vmem:[#allocation4 + $0x158] sm:$0xff]
    %v327 = vld [vmem:[#allocation4 + $0x160] sm:$0xff]
    %v328 = vld [vmem:[#allocation4 + $0x168] sm:$0xff]
    %v329 = vld [vmem:[#allocation4 + $0x170] sm:$0xff]
    %v330 = vld [vmem:[#allocation4 + $0x178] sm:$0xff]
    %v331 = vld [vmem:[%s4] sm:$0x3]
    %v333 = vlaneseq
    %v334 = vshrl.u32 %v333, 7
    %v335 = vsub.s32 0, %v334
    %v336 = vrot.slane %v331, %v335
    %v337 = vlaneseq
    %v338 = vshrl.u32 %v337, 7
    %v339 = vsub.s32 1, %v338
    %v340 = vrot.slane %v331, %v339
    %v391 = vunpack.c.l.b16 %v283
    %v392 = vunpack.c.h.b16 %v283
    %v393 = vunpack.c.l.b16 %v284
    %v394 = vunpack.c.h.b16 %v284
    %v395 = vunpack.c.l.b16 %v285
    %v396 = vunpack.c.h.b16 %v285
    %v397 = vunpack.c.l.b16 %v286
    %v398 = vunpack.c.h.b16 %v286
    %v399 = vunpack.c.l.b16 %v287
    %v400 = vunpack.c.h.b16 %v287
    %v401 = vunpack.c.l.b16 %v288
    %v402 = vunpack.c.h.b16 %v288
    %v403 = vunpack.c.l.b16 %v289
    %v404 = vunpack.c.h.b16 %v289
    %v405 = vunpack.c.l.b16 %v290
    %v406 = vunpack.c.h.b16 %v290
    %v407 = vunpack.c.l.b16 %v291
    %v408 = vunpack.c.h.b16 %v291
    %v409 = vunpack.c.l.b16 %v292
    %v410 = vunpack.c.h.b16 %v292
    %v411 = vunpack.c.l.b16 %v293
    %v412 = vunpack.c.h.b16 %v293
    %v413 = vunpack.c.l.b16 %v294
    %v414 = vunpack.c.h.b16 %v294
    %v415 = vunpack.c.l.b16 %v295
    %v416 = vunpack.c.h.b16 %v295
    %v417 = vunpack.c.l.b16 %v296
    %v418 = vunpack.c.h.b16 %v296
    %v419 = vunpack.c.l.b16 %v297
    %v420 = vunpack.c.h.b16 %v297
    %v421 = vunpack.c.l.b16 %v298
    %v422 = vunpack.c.h.b16 %v298
    %v423 = vunpack.c.l.b16 %v299
    %v424 = vunpack.c.h.b16 %v299
    %v425 = vunpack.c.l.b16 %v300
    %v426 = vunpack.c.h.b16 %v300
    %v427 = vunpack.c.l.b16 %v301
    %v428 = vunpack.c.h.b16 %v301
    %v429 = vunpack.c.l.b16 %v302
    %v430 = vunpack.c.h.b16 %v302
    %v431 = vunpack.c.l.b16 %v303
    %v432 = vunpack.c.h.b16 %v303
    %v433 = vunpack.c.l.b16 %v304
    %v434 = vunpack.c.h.b16 %v304
    %v435 = vunpack.c.l.b16 %v305
    %v436 = vunpack.c.h.b16 %v305
    %v437 = vunpack.c.l.b16 %v306
    %v438 = vunpack.c.h.b16 %v306
    %v439 = vunpack.c.l.b16 %v307
    %v440 = vunpack.c.h.b16 %v307
    %v441 = vunpack.c.l.b16 %v308
    %v442 = vunpack.c.h.b16 %v308
    %v443 = vunpack.c.l.b16 %v309
    %v444 = vunpack.c.h.b16 %v309
    %v445 = vunpack.c.l.b16 %v310
    %v446 = vunpack.c.h.b16 %v310
    %v447 = vunpack.c.l.b16 %v311
    %v448 = vunpack.c.h.b16 %v311
    %v449 = vunpack.c.l.b16 %v312
    %v450 = vunpack.c.h.b16 %v312
    %v451 = vunpack.c.l.b16 %v313
    %v452 = vunpack.c.h.b16 %v313
    %v453 = vunpack.c.l.b16 %v314
    %v454 = vunpack.c.h.b16 %v314
    %v455 = vunpack.c.l.b16 %v315
    %v456 = vunpack.c.h.b16 %v315
    %v457 = vunpack.c.l.b16 %v316
    %v458 = vunpack.c.h.b16 %v316
    %v459 = vunpack.c.l.b16 %v317
    %v460 = vunpack.c.h.b16 %v317
    %v461 = vunpack.c.l.b16 %v318
    %v462 = vunpack.c.h.b16 %v318
    %v463 = vunpack.c.l.b16 %v319
    %v464 = vunpack.c.h.b16 %v319
    %v465 = vunpack.c.l.b16 %v320
    %v466 = vunpack.c.h.b16 %v320
    %v467 = vunpack.c.l.b16 %v321
    %v468 = vunpack.c.h.b16 %v321
    %v469 = vunpack.c.l.b16 %v322
    %v470 = vunpack.c.h.b16 %v322
    %v471 = vunpack.c.l.b16 %v323
    %v472 = vunpack.c.h.b16 %v323
    %v473 = vunpack.c.l.b16 %v324
    %v474 = vunpack.c.h.b16 %v324
    %v475 = vunpack.c.l.b16 %v325
    %v476 = vunpack.c.h.b16 %v325
    %v477 = vunpack.c.l.b16 %v326
    %v478 = vunpack.c.h.b16 %v326
    %v479 = vunpack.c.l.b16 %v327
    %v480 = vunpack.c.h.b16 %v327
    %v481 = vunpack.c.l.b16 %v328
    %v482 = vunpack.c.h.b16 %v328
    %v483 = vunpack.c.l.b16 %v329
    %v484 = vunpack.c.h.b16 %v329
    %v485 = vunpack.c.l.b16 %v330
    %v486 = vunpack.c.h.b16 %v330
    %v487 = vpack.c.b16 %v393, %v391
    %v488 = vpack.c.b16 %v394, %v392
    %v489 = vpack.c.b16 %v397, %v395
    %v490 = vpack.c.b16 %v398, %v396
    %v491 = vpack.c.b16 %v401, %v399
    %v492 = vpack.c.b16 %v402, %v400
    %v493 = vpack.c.b16 %v405, %v403
    %v494 = vpack.c.b16 %v406, %v404
    %v495 = vpack.c.b16 %v409, %v407
    %v496 = vpack.c.b16 %v410, %v408
    %v497 = vpack.c.b16 %v413, %v411
    %v498 = vpack.c.b16 %v414, %v412
    %v499 = vpack.c.b16 %v417, %v415
    %v500 = vpack.c.b16 %v418, %v416
    %v501 = vpack.c.b16 %v421, %v419
    %v502 = vpack.c.b16 %v422, %v420
    %v503 = vpack.c.b16 %v425, %v423
    %v504 = vpack.c.b16 %v426, %v424
    %v505 = vpack.c.b16 %v429, %v427
    %v506 = vpack.c.b16 %v430, %v428
    %v507 = vpack.c.b16 %v433, %v431
    %v508 = vpack.c.b16 %v434, %v432
    %v509 = vpack.c.b16 %v437, %v435
    %v510 = vpack.c.b16 %v438, %v436
    %v511 = vpack.c.b16 %v441, %v439
    %v512 = vpack.c.b16 %v442, %v440
    %v513 = vpack.c.b16 %v445, %v443
    %v514 = vpack.c.b16 %v446, %v444
    %v515 = vpack.c.b16 %v449, %v447
    %v516 = vpack.c.b16 %v450, %v448
    %v517 = vpack.c.b16 %v453, %v451
    %v518 = vpack.c.b16 %v454, %v452
    %v519 = vpack.c.b16 %v457, %v455
    %v520 = vpack.c.b16 %v458, %v456
    %v521 = vpack.c.b16 %v461, %v459
    %v522 = vpack.c.b16 %v462, %v460
    %v523 = vpack.c.b16 %v465, %v463
    %v524 = vpack.c.b16 %v466, %v464
    %v525 = vpack.c.b16 %v469, %v467
    %v526 = vpack.c.b16 %v470, %v468
    %v527 = vpack.c.b16 %v473, %v471
    %v528 = vpack.c.b16 %v474, %v472
    %v529 = vpack.c.b16 %v477, %v475
    %v530 = vpack.c.b16 %v478, %v476
    %v531 = vpack.c.b16 %v481, %v479
    %v532 = vpack.c.b16 %v482, %v480
    %v533 = vpack.c.b16 %v485, %v483
    %v534 = vpack.c.b16 %v486, %v484
    %583 = vmatprep.subr.bf16.mxu0 %v488
    %584 = vmatpush1.bf16.msra.mxu0 %v487
    %585 = vmatprep.subr.bf16.mxu0 %v490
    %586 = vmatpush1.bf16.msra.mxu0 %v489
    %587 = vmatprep.subr.bf16.mxu0 %v492
    %588 = vmatpush1.bf16.msra.mxu0 %v491
    %589 = vmatprep.subr.bf16.mxu0 %v494
    %590 = vmatpush1.bf16.msra.mxu0 %v493
    %591 = vmatprep.subr.bf16.mxu0 %v496
    %592 = vmatpush1.bf16.msra.mxu0 %v495
    %593 = vmatprep.subr.bf16.mxu0 %v498
    %594 = vmatpush1.bf16.msra.mxu0 %v497
    %595 = vmatprep.subr.bf16.mxu0 %v500
    %596 = vmatpush1.bf16.msra.mxu0 %v499
    %597 = vmatprep.subr.bf16.mxu0 %v502
    %598 = vmatpush1.bf16.msra.mxu0 %v501
    %599 = vmatprep.subr.bf16.mxu0 %v504
    %600 = vmatpush1.bf16.msra.mxu0 %v503
    %601 = vmatprep.subr.bf16.mxu0 %v506
    %602 = vmatpush1.bf16.msra.mxu0 %v505
    %603 = vmatprep.subr.bf16.mxu0 %v508
    %604 = vmatpush1.bf16.msra.mxu0 %v507
    %605 = vmatprep.subr.bf16.mxu0 %v510
    %606 = vmatpush1.bf16.msra.mxu0 %v509
    %607 = vmatprep.subr.bf16.mxu0 %v512
    %608 = vmatpush1.bf16.msra.mxu0 %v511
    %609 = vmatprep.subr.bf16.mxu0 %v514
    %610 = vmatpush1.bf16.msra.mxu0 %v513
    %611 = vmatprep.subr.bf16.mxu0 %v516
    %612 = vmatpush1.bf16.msra.mxu0 %v515
    %613 = vmatprep.subr.bf16.mxu0 %v518
    %614 = vmatpush1.bf16.msra.mxu0 %v517
    %615 = vmatprep.mubr.bf16.mxu0 %v281
    %616 = vmatmul.mubr.bf16.gmra.mrb[0].mxu0 %v280
    %v617 = vpop.f32.mrb[0].mxu0
    %v618 = vadd.f32 %v336, %v617
    %v619 = vpop.f32.mrb[0].mxu0
    %v620 = vadd.f32 %v340, %v619
    %v621 = vpop.f32.mrb[0].mxu0
    %v622 = vadd.f32 %v336, %v621
    %v623 = vpop.f32.mrb[0].mxu0
    %v624 = vadd.f32 %v340, %v623
    %625 = vdwg.mxu0
    %626 = vmatprep.subr.bf16.mxu0 %v520
    %627 = vmatpush1.bf16.msra.mxu0 %v519
    %628 = vmatprep.subr.bf16.mxu0 %v522
    %629 = vmatpush1.bf16.msra.mxu0 %v521
    %630 = vmatprep.subr.bf16.mxu0 %v524
    %631 = vmatpush1.bf16.msra.mxu0 %v523
    %632 = vmatprep.subr.bf16.mxu0 %v526
    %633 = vmatpush1.bf16.msra.mxu0 %v525
    %634 = vmatprep.subr.bf16.mxu0 %v528
    %635 = vmatpush1.bf16.msra.mxu0 %v527
    %636 = vmatprep.subr.bf16.mxu0 %v530
    %637 = vmatpush1.bf16.msra.mxu0 %v529
    %638 = vmatprep.subr.bf16.mxu0 %v532
    %639 = vmatpush1.bf16.msra.mxu0 %v531
    %640 = vmatprep.subr.bf16.mxu0 %v534
    %641 = vmatpush1.bf16.msra.mxu0 %v533
    %642 = vmatprep.subr.bf16.mxu0 0
    %643 = vmatpush1.bf16.msra.mxu0 0
    %644 = vmatprep.subr.bf16.mxu0 0
    %645 = vmatpush1.bf16.msra.mxu0 0
    %646 = vmatprep.subr.bf16.mxu0 0
    %647 = vmatpush1.bf16.msra.mxu0 0
    %648 = vmatprep.subr.bf16.mxu0 0
    %649 = vmatpush1.bf16.msra.mxu0 0
    %650 = vmatprep.subr.bf16.mxu0 0
    %651 = vmatpush1.bf16.msra.mxu0 0
    %652 = vmatprep.subr.bf16.mxu0 0
    %653 = vmatpush1.bf16.msra.mxu0 0
    %654 = vmatprep.subr.bf16.mxu0 0
    %655 = vmatpush1.bf16.msra.mxu0 0
    %656 = vmatprep.subr.bf16.mxu0 0
    %657 = vmatpush1.bf16.msra.mxu0 0
    %658 = vmatprep.mubr.bf16.mxu0 0
    %659 = vmatmul.mubr.bf16.gmra.mrb[0].mxu0 %v282
    %v660 = vpop.f32.mrb[0].mxu0
    %v661 = vadd.f32 %v618, %v660
    %v662 = vpop.f32.mrb[0].mxu0
    %v663 = vadd.f32 %v620, %v662
    %v664 = vpop.f32.mrb[0].mxu0
    %v665 = vadd.f32 %v622, %v664
    %v666 = vpop.f32.mrb[0].mxu0
    %v667 = vadd.f32 %v624, %v666
    %668 = vdwg.mxu0
    %v669 = vmul.f32 %v661, 0.5
    %v670 = vmul.f32 %v663, 0.5
    %v671 = vmul.f32 %v665, 0.5
    %v672 = vmul.f32 %v667, 0.5
    %v673 = vtanh.pop %v669
    %v674 = vtanh.pop %v670
    %v675 = vtanh.pop %v671
    %v676 = vtanh.pop %v672
    %v677 = vmul.f32 %v673, 0.5
    %v678 = vmul.f32 %v674, 0.5
    %v679 = vmul.f32 %v675, 0.5
    %v680 = vmul.f32 %v676, 0.5
    %v681 = vadd.f32 %v677, 0.5
    %v682 = vadd.f32 %v678, 0.5
    %v683 = vadd.f32 %v679, 0.5
    %v684 = vadd.f32 %v680, 0.5
    %v685 = vpack.c.bf16 %v683, %v681
    %v686 = vpack.c.bf16 %v684, %v682
    %v687 = vld [vmem:[#allocation6] sm:$0xf]
    %v688 = vld [vmem:[#allocation6 + $0x4] sm:$0xf]
    %v689 = vld [vmem:[#allocation6 + $0x8] sm:$0xf]
    %v690 = vld [vmem:[#allocation6 + $0xc] sm:$0xf]
    %v691 = vld [vmem:[#allocation6 + $0x10] sm:$0xf]
    %v692 = vld [vmem:[#allocation6 + $0x14] sm:$0xf]
    %v693 = vld [vmem:[#allocation6 + $0x18] sm:$0xf]
    %v694 = vld [vmem:[#allocation6 + $0x1c] sm:$0xf]
    %v695 = vld [vmem:[#allocation6 + $0x20] sm:$0xf]
    %v696 = vld [vmem:[#allocation6 + $0x24] sm:$0xf]
    %v697 = vld [vmem:[#allocation6 + $0x28] sm:$0xf]
    %v698 = vld [vmem:[#allocation6 + $0x2c] sm:$0xf]
    %v699 = vld [vmem:[#allocation6 + $0x30] sm:$0xf]
    %v700 = vld [vmem:[#allocation6 + $0x34] sm:$0xf]
    %v701 = vld [vmem:[#allocation6 + $0x38] sm:$0xf]
    %v702 = vld [vmem:[#allocation6 + $0x3c] sm:$0xf]
    %v703 = vld [vmem:[#allocation6 + $0x40] sm:$0xf]
    %v704 = vld [vmem:[#allocation6 + $0x44] sm:$0xf]
    %v705 = vld [vmem:[#allocation6 + $0x48] sm:$0xf]
    %v706 = vld [vmem:[#allocation6 + $0x4c] sm:$0xf]
    %v707 = vld [vmem:[#allocation6 + $0x50] sm:$0xf]
    %v708 = vld [vmem:[#allocation6 + $0x54] sm:$0xf]
    %v709 = vld [vmem:[#allocation6 + $0x58] sm:$0xf]
    %v710 = vld [vmem:[#allocation6 + $0x5c] sm:$0xf]
    %v711 = vld [vmem:[#allocation6 + $0x60] sm:$0xf]
    %v712 = vld [vmem:[#allocation6 + $0x64] sm:$0xf]
    %v713 = vld [vmem:[#allocation6 + $0x68] sm:$0xf]
    %v714 = vld [vmem:[#allocation6 + $0x6c] sm:$0xf]
    %v715 = vld [vmem:[#allocation6 + $0x70] sm:$0xf]
    %v716 = vld [vmem:[#allocation6 + $0x74] sm:$0xf]
    %v717 = vld [vmem:[#allocation6 + $0x78] sm:$0xf]
    %v718 = vld [vmem:[#allocation6 + $0x7c] sm:$0xf]
    %v719 = vld [vmem:[%s6] sm:$0x1]
    %v721 = vlaneseq
    %v722 = vshrl.u32 %v721, 7
    %v723 = vsub.s32 0, %v722
    %v724 = vrot.slane %v719, %v723
    %v758 = vunpack.c.l.b16 %v687
    %v759 = vunpack.c.l.b16 %v688
    %v760 = vunpack.c.l.b16 %v689
    %v761 = vunpack.c.l.b16 %v690
    %v762 = vunpack.c.l.b16 %v691
    %v763 = vunpack.c.l.b16 %v692
    %v764 = vunpack.c.l.b16 %v693
    %v765 = vunpack.c.l.b16 %v694
    %v766 = vunpack.c.l.b16 %v695
    %v767 = vunpack.c.l.b16 %v696
    %v768 = vunpack.c.l.b16 %v697
    %v769 = vunpack.c.l.b16 %v698
    %v770 = vunpack.c.l.b16 %v699
    %v771 = vunpack.c.l.b16 %v700
    %v772 = vunpack.c.l.b16 %v701
    %v773 = vunpack.c.l.b16 %v702
    %v774 = vunpack.c.l.b16 %v703
    %v775 = vunpack.c.l.b16 %v704
    %v776 = vunpack.c.l.b16 %v705
    %v777 = vunpack.c.l.b16 %v706
    %v778 = vunpack.c.l.b16 %v707
    %v779 = vunpack.c.l.b16 %v708
    %v780 = vunpack.c.l.b16 %v709
    %v781 = vunpack.c.l.b16 %v710
    %v782 = vunpack.c.l.b16 %v711
    %v783 = vunpack.c.l.b16 %v712
    %v784 = vunpack.c.l.b16 %v713
    %v785 = vunpack.c.l.b16 %v714
    %v786 = vunpack.c.l.b16 %v715
    %v787 = vunpack.c.l.b16 %v716
    %v788 = vunpack.c.l.b16 %v717
    %v789 = vunpack.c.l.b16 %v718
    %v790 = vpack.c.b16 %v759, %v758
    %v791 = vpack.c.b16 %v761, %v760
    %v792 = vpack.c.b16 %v763, %v762
    %v793 = vpack.c.b16 %v765, %v764
    %v794 = vpack.c.b16 %v767, %v766
    %v795 = vpack.c.b16 %v769, %v768
    %v796 = vpack.c.b16 %v771, %v770
    %v797 = vpack.c.b16 %v773, %v772
    %v798 = vpack.c.b16 %v775, %v774
    %v799 = vpack.c.b16 %v777, %v776
    %v800 = vpack.c.b16 %v779, %v778
    %v801 = vpack.c.b16 %v781, %v780
    %v802 = vpack.c.b16 %v783, %v782
    %v803 = vpack.c.b16 %v785, %v784
    %v804 = vpack.c.b16 %v787, %v786
    %v805 = vpack.c.b16 %v789, %v788
    %822 = vmatprep.subr.bf16.mxu0 0
    %823 = vmatpush1.bf16.msra.mxu0 %v790
    %824 = vmatprep.subr.bf16.mxu0 0
    %825 = vmatpush1.bf16.msra.mxu0 %v791
    %826 = vmatprep.subr.bf16.mxu0 0
    %827 = vmatpush1.bf16.msra.mxu0 %v792
    %828 = vmatprep.subr.bf16.mxu0 0
    %829 = vmatpush1.bf16.msra.mxu0 %v793
    %830 = vmatprep.subr.bf16.mxu0 0
    %831 = vmatpush1.bf16.msra.mxu0 %v794
    %832 = vmatprep.subr.bf16.mxu0 0
    %833 = vmatpush1.bf16.msra.mxu0 %v795
    %834 = vmatprep.subr.bf16.mxu0 0
    %835 = vmatpush1.bf16.msra.mxu0 %v796
    %836 = vmatprep.subr.bf16.mxu0 0
    %837 = vmatpush1.bf16.msra.mxu0 %v797
    %838 = vmatprep.subr.bf16.mxu0 0
    %839 = vmatpush1.bf16.msra.mxu0 %v798
    %840 = vmatprep.subr.bf16.mxu0 0
    %841 = vmatpush1.bf16.msra.mxu0 %v799
    %842 = vmatprep.subr.bf16.mxu0 0
    %843 = vmatpush1.bf16.msra.mxu0 %v800
    %844 = vmatprep.subr.bf16.mxu0 0
    %845 = vmatpush1.bf16.msra.mxu0 %v801
    %846 = vmatprep.subr.bf16.mxu0 0
    %847 = vmatpush1.bf16.msra.mxu0 %v802
    %848 = vmatprep.subr.bf16.mxu0 0
    %849 = vmatpush1.bf16.msra.mxu0 %v803
    %850 = vmatprep.subr.bf16.mxu0 0
    %851 = vmatpush1.bf16.msra.mxu0 %v804
    %852 = vmatprep.subr.bf16.mxu0 0
    %853 = vmatpush1.bf16.msra.mxu0 %v805
    %854 = vmatprep.mubr.bf16.mxu0 %v686
    %855 = vmatmul.mubr.bf16.gmra.mrb[0].mxu0 %v685
    %v856 = vpop.f32.mrb[0].mxu0
    %v857 = vadd.f32 %v724, %v856
    %v858 = vpop.f32.mrb[0].mxu0
    %v859 = vpop.f32.mrb[0].mxu0
    %v860 = vadd.f32 %v724, %v859
    %v861 = vpop.f32.mrb[0].mxu0
    %862 = vdwg.mxu0
    %v863 = vlaneseq
    %v864 = vand.u32 %v863, 127
    %vm865 = vcmp.lt.s32.totalorder %v864, 10
    %v866 = vsel %vm865, %v857, -1e+30
    %v867 = vsel %vm865, %v860, -1e+30
    %868 = vmax.xlane.f32.xlu0 %v866
    %v869 = vpop.xlane.xlu0 %868
    %870 = vmax.xlane.f32.xlu0 %v867
    %v871 = vpop.xlane.xlu0 %870
    %v872 = vsub.f32 %v866, %v869
    %v873 = vsub.f32 %v867, %v871
    %v874 = vmul.f32 %v872, 1.442695
    %v875 = vpow.pop %v874
    %v876 = vmul.f32 %v873, 1.442695
    %v877 = vpow.pop %v876
    %878 = vadd.xlane.f32.xlu0 %v875
    %v879 = vpop.xlane.xlu0 %878
    %880 = vadd.xlane.f32.xlu0 %v877
    %v881 = vpop.xlane.xlu0 %880
    %v882 = vrcp.pop %v879
    %v883 = vmul.f32 %v875, %v882
    %v884 = vrcp.pop %v881
    %v885 = vmul.f32 %v877, %v884
    %v886 = vpack.c.bf16 %v885, %v883
    %v888 = vunpack.c.l.b16 %v886
    %v889 = vunpack.c.h.b16 %v886
    %v890 = vpack.c.b16 %v888, %v888
    %v891 = vpack.c.b16 %v889, %v889
    %894 = vst [vmem:[%s7] sm:$0xf] %v890
    %895 = vst [vmem:[%s7 + $0x4] sm:$0xf] %v891
    // Predicated region
    $region42: #{simple_nn_forward.1} parent=1 // pred_check
      _
    $region43: #{simple_nn_forward.1} parent=1 // pred_check_branch
      %897 = sbr.rel (0) target = $region45
    $region44: #{simple_nn_forward.1} parent=1 // pred_region
      _
    $region45: #{simple_nn_forward.1} parent=1 // pred_fallthru
      _
    // Predicated region
    $region46: #{simple_nn_forward.1} parent=1 // pred_check
      _
    $region47: #{simple_nn_forward.1} parent=1 // pred_check_branch
      %899 = sbr.rel (0) target = $region49
    $region48: #{simple_nn_forward.1} parent=1 // pred_region
      _
    $region49: #{simple_nn_forward.1} parent=1 // pred_fallthru
      _
    %900 = vsyncpa [#allocation3], 1
    %901 = vsyncpa [#allocation5], 1

</llo_original>
